<compile_context>
chip_gen: v7x
topology: tpu7x:2x2x1
jax: 0.10.0
libtpu: 0.0.40
codegen_flags: <defaults>
</compile_context>

<pallas_src>
import functools
import math
from collections import namedtuple

import jax
import jax.numpy as jnp
from jax import lax
from jax.experimental import pallas as pl
from jax.experimental.pallas import tpu as pltpu

LOG_2PI = math.log(2.0 * math.pi)

_TARGET_STEP_BYTES = 4 << 20     # combined input bytes streamed per grid step
_MAX_BLOCK_BYTES = 8 << 20       # per-stream block cap (VMEM safety)
_JNP_FALLBACK_ELEMS = 1 << 16    # below this, skip the kernel launch entirely
_SUBLANE = {1: 32, 2: 16, 4: 8}  # packed sublane multiple per dtype itemsize


def _cdiv(a, b):
    return -(-a // b)


def _round_up(a, b):
    return _cdiv(a, b) * b


# rows/cols: logical 2-D view of the stream; tile_rows/tiles: row tiling;
# square: True for the z stream (sum of squares) else plain sum;
# acc_rows: sublane height of the resident f32 accumulator.
_Stream = namedtuple("_Stream", "rows cols tile_rows tiles square acc_rows")


def _plan_streams(arrays_2d, squares, target_step_bytes, max_block_bytes):
    """Balance per-stream tile sizes so all streams finish in ~the same number
    of grid steps and the combined per-step footprint stays ~target bytes."""
    total_bytes = sum(int(a.size) * a.dtype.itemsize for a in arrays_2d)
    n_target = max(1, _cdiv(total_bytes, target_step_bytes))

    plans = []
    for a, square in zip(arrays_2d, squares):
        rows, cols = int(a.shape[0]), int(a.shape[1])
        itemsize = a.dtype.itemsize
        sub = _SUBLANE.get(itemsize, 8)
        row_bytes = max(1, cols * itemsize)

        cap_rows = max(sub, (max_block_bytes // row_bytes) // sub * sub)
        tr = _round_up(max(1, _cdiv(rows, n_target)), sub)
        tr = min(tr, cap_rows)
        if tr >= rows:
            tr = rows                      # one full tile (no alignment needed)
        if tr * row_bytes > max_block_bytes:
            return None, None              # pathological last dim -> jnp path
        tiles = _cdiv(rows, tr)
        acc_rows = 8 if tr % 8 == 0 else tr
        plans.append(_Stream(rows, cols, tr, tiles, square, acc_rows))

    n_steps = max(p.tiles for p in plans)
    return plans, n_steps


def _make_index_map(tiles):
    if tiles == 1:
        return lambda i: (0, 0)
    last = tiles - 1
    # Clamp once the stream is exhausted: block index stops changing, so the
    # pipeline skips re-fetching it; accumulation is gated off with pl.when.
    return lambda i: (jnp.minimum(i, last), 0)


def _make_kernel(plans, n_steps):
    n = len(plans)

    def _accumulate(i, x_ref, acc_ref, p):
        def do(mask_tail):
            x = x_ref[...].astype(jnp.float32)
            if mask_tail:
                row = lax.broadcasted_iota(jnp.int32, (p.tile_rows, p.cols), 0)
                keep = (i * p.tile_rows + row) < p.rows
                x = jnp.where(keep, x, 0.0)
            if p.square:
                x = x * x
            if p.acc_rows == 8 and p.tile_rows != 8:
                # Natural (sublane-group) reshape; sum over groups is pure VPU.
                part = jnp.sum(x.reshape(p.tile_rows // 8, 8, p.cols), axis=0)
            else:
                part = x
            acc_ref[...] += part

        ragged = (p.rows % p.tile_rows) != 0
        last = p.tiles - 1
        if not ragged:
            if p.tiles == n_steps:
                do(False)                       # active on every step
            else:
                pl.when(i < p.tiles)(lambda: do(False))
        else:
            if p.tiles > 1:
                pl.when(i < last)(lambda: do(False))
            pl.when(i == last)(lambda: do(True))  # mask only the ragged tail

    def kernel(*refs):
        in_refs = refs[:n]
        acc_refs = refs[n:]
        i = pl.program_id(0)

        @pl.when(i == 0)
        def _init():
            for acc in acc_refs:
                acc[...] = jnp.zeros_like(acc)

        for x_ref, acc_ref, p in zip(in_refs, acc_refs, plans):
            _accumulate(i, x_ref, acc_ref, p)

    return kernel


def _fused_reduce(arrays_2d, squares, target_step_bytes):
    """One pallas_call streaming all 2-D arrays once; returns the tuple of tiny
    f32 accumulators (one per stream), or None when the shapes are unsuitable."""
    plans, n_steps = _plan_streams(arrays_2d, squares, target_step_bytes,
                                   _MAX_BLOCK_BYTES)
    if plans is None:
        return None

    in_specs = [pl.BlockSpec((p.tile_rows, p.cols), _make_index_map(p.tiles))
                for p in plans]
    out_shape = tuple(jax.ShapeDtypeStruct((p.acc_rows, p.cols), jnp.float32)
                      for p in plans)
    out_specs = tuple(pl.BlockSpec((p.acc_rows, p.cols), lambda i: (0, 0))
                      for p in plans)

    in_bytes = sum(int(a.size) * a.dtype.itemsize for a in arrays_2d)
    out_bytes = sum(p.acc_rows * p.cols * 4 for p in plans)
    flops = int(sum((2 if p.square else 1) * p.rows * p.cols for p in plans))

    return pl.pallas_call(
        _make_kernel(plans, n_steps),
        out_shape=out_shape,
        grid=(n_steps,),
        in_specs=in_specs,
        out_specs=out_specs,
        compiler_params=pltpu.CompilerParams(
            dimension_semantics=("arbitrary",)),
        cost_estimate=pl.CostEstimate(flops=flops, transcendentals=0,
                                      bytes_accessed=in_bytes + out_bytes),
    )(*arrays_2d)


def _to_2d(a):
    a = jnp.asarray(a)
    if a.ndim == 0:
        return a.reshape(1, 1)
    if a.ndim == 1:
        return a.reshape(1, a.shape[0])
    return a.reshape(-1, a.shape[-1])   # free collapse of leading dims


def glow_loss(z, log_s_list, log_det_W_list, sigma: float = 1.0, *,
              use_pallas=None, target_step_bytes=_TARGET_STEP_BYTES):
    """JAX/Pallas equivalent of GlowLoss.forward((z, log_s_list, log_det_W_list)).

    Matching the reference PyTorch forward, `sigma` is stored on the module but
    never used in the loss computation."""
    del sigma
    n_z = int(z.shape[0]) * int(z.shape[1]) * int(z.shape[2])

    log_det_W_total = jnp.float32(0.0)
    for w in log_det_W_list:
        log_det_W_total = log_det_W_total + jnp.sum(jnp.asarray(w, jnp.float32))

    streams, squares = [_to_2d(z)], [True]
    for s in log_s_list:
        s = jnp.asarray(s)
        if s.size:
            streams.append(_to_2d(s))
            squares.append(False)

    total_elems = sum(int(a.size) for a in streams)
    go_pallas = (use_pallas if use_pallas is not None
                 else total_elems >= _JNP_FALLBACK_ELEMS)

    accs = _fused_reduce(streams, squares, target_step_bytes) if go_pallas else None

    if accs is None:
        # Tiny-input fast path (or shape fallback): plain jnp reductions.
        sum_z_sq = jnp.sum(jnp.square(jnp.asarray(z, jnp.float32)))
        log_s_total = jnp.float32(0.0)
        for s in log_s_list:
            log_s_total = log_s_total + jnp.sum(jnp.asarray(s, jnp.float32))
    else:
        sum_z_sq = jnp.sum(accs[0])
        log_s_total = jnp.float32(0.0)
        for a in accs[1:]:
            log_s_total = log_s_total + jnp.sum(a)

    # log_p_sum = sum(-0.5*log(2*pi) - 0.5*z**2); constant applied over the true
    # element count in scalar glue, so the kernel is a pure streaming reduce.
    log_p_sum = (-0.5 * LOG_2PI) * n_z - 0.5 * sum_z_sq

    loss = -(log_p_sum + log_s_total + log_det_W_total)
    return loss / n_z


def glow_loss_reference(z, log_s_list, log_det_W_list):
    """Pure-jnp reference (f32 accumulation) for correctness checking."""
    log_s_total = sum(jnp.sum(jnp.asarray(ls, jnp.float32)) for ls in log_s_list)
    log_det_W_total = sum(jnp.sum(jnp.asarray(w, jnp.float32))
                          for w in log_det_W_list)
    zf = jnp.asarray(z, jnp.float32)
    log_p = -0.5 * LOG_2PI - 0.5 * zf * zf
    loss = -(jnp.sum(log_p) + log_s_total + log_det_W_total)
    return loss / (z.shape[0] * z.shape[1] * z.shape[2])


if __name__ == "__main__":
    key = jax.random.PRNGKey(0)
    k_z, k_s0, k_s1, k_w, k_z2, k_s2, k_s3, k_z4, k_s4 = jax.random.split(key, 9)

    # Case 1: small Glow/WaveGlow-style output, forced through the Pallas path.
    #   z: (batch=2, groups=8, time=256); log_s: two of (2, 4, 256); two logdets.
    z = jax.random.normal(k_z, (2, 8, 256), dtype=jnp.float32)
    log_s_list = [
        0.1 * jax.random.normal(k_s0, (2, 4, 256), dtype=jnp.float32),
        0.1 * jax.random.normal(k_s1, (2, 4, 256), dtype=jnp.float32),
    ]
    log_det_W_list = list(jax.random.normal(k_w, (2,), dtype=jnp.float32))

    pallas_fn = jax.jit(functools.partial(glow_loss, use_pallas=True))
    loss = pallas_fn(z, log_s_list, log_det_W_list)
    jax.block_until_ready(loss)
    ref = glow_loss_reference(z, log_s_list, log_det_W_list)
    assert jnp.allclose(loss, ref, rtol=1e-5, atol=1e-5), (loss, ref)

    # Case 2: ragged row tiles + clamped/gated streams (shrink the per-step byte
    # budget so these small arrays still span several grid steps).
    z2 = jax.random.normal(k_z2, (3, 7, 384), dtype=jnp.float32)
    log_s_list2 = [
        0.05 * jax.random.normal(k_s2, (3, 5, 384), dtype=jnp.float32),
        0.05 * jax.random.normal(k_s3, (3, 5, 384), dtype=jnp.float32),
    ]
    log_det_W_list2 = [jnp.float32(0.3), jnp.float32(-0.7)]
    pallas_small_blocks = jax.jit(functools.partial(
        glow_loss, use_pallas=True, target_step_bytes=32 * 1024))
    loss2 = pallas_small_blocks(z2, log_s_list2, log_det_W_list2)
    jax.block_until_ready(loss2)
    ref2 = glow_loss_reference(z2, log_s_list2, log_det_W_list2)
    assert jnp.allclose(loss2, ref2, rtol=1e-5, atol=1e-5), (loss2, ref2)

    # Case 3: bf16 inputs stay bf16 end-to-end (16-row packed sublane tiling).
    z4 = jax.random.normal(k_z4, (4, 6, 256), dtype=jnp.float32).astype(jnp.bfloat16)
    log_s_list4 = [(0.1 * jax.random.normal(k_s4, (4, 3, 256), jnp.float32)
                    ).astype(jnp.bfloat16)]
    log_det_W_list4 = [jnp.float32(0.5)]
    pallas_bf16 = jax.jit(functools.partial(
        glow_loss, use_pallas=True, target_step_bytes=16 * 1024))
    loss4 = pallas_bf16(z4, log_s_list4, log_det_W_list4)
    jax.block_until_ready(loss4)
    ref4 = glow_loss_reference(z4, log_s_list4, log_det_W_list4)
    assert jnp.allclose(loss4, ref4, rtol=1e-3, atol=1e-3), (loss4, ref4)

    # Case 4: auto dispatch (tiny input -> jnp fast path), same semantics.
    loss5 = jax.jit(glow_loss)(z, log_s_list, log_det_W_list)
    jax.block_until_ready(loss5)
    assert jnp.allclose(loss5, ref, rtol=1e-5, atol=1e-5), (loss5, ref)

    print("KERNEL_OK")
</pallas_src>

<mosaic_0001>
module attributes {stable_mosaic.version = 11 : i64} {
  func.func @kernel(%arg0: i32, %arg1: memref<16x256xf32, #tpu.memory_space<vmem>>, %arg2: memref<8x256xf32, #tpu.memory_space<vmem>>, %arg3: memref<8x256xf32, #tpu.memory_space<vmem>>, %arg4: memref<8x256xf32, #tpu.memory_space<vmem>>, %arg5: memref<8x256xf32, #tpu.memory_space<vmem>>, %arg6: memref<8x256xf32, #tpu.memory_space<vmem>>) attributes {dimension_semantics = [#tpu.dimension_semantics<arbitrary>], iteration_bounds = array<i64: 1>, scalar_prefetch = 0 : i64, scratch_operands = 0 : i64, tpu.core_type = #tpu.core_type<tc>, window_params = [{pipeline_mode = #tpu.pipeline_mode<synchronous>, transform_indices = @transform_0, window_bounds = array<i64: 16, 256>}, {pipeline_mode = #tpu.pipeline_mode<synchronous>, transform_indices = @transform_1, window_bounds = array<i64: 8, 256>}, {pipeline_mode = #tpu.pipeline_mode<synchronous>, transform_indices = @transform_2, window_bounds = array<i64: 8, 256>}, {pipeline_mode = #tpu.pipeline_mode<synchronous>, transform_indices = @transform_3, window_bounds = array<i64: 8, 256>}, {pipeline_mode = #tpu.pipeline_mode<synchronous>, transform_indices = @transform_4, window_bounds = array<i64: 8, 256>}, {pipeline_mode = #tpu.pipeline_mode<synchronous>, transform_indices = @transform_5, window_bounds = array<i64: 8, 256>}]} {
    %c0_i32 = arith.constant 0 : i32
    %0 = arith.cmpi eq, %arg0, %c0_i32 : i32
    %1 = arith.extui %0 : i1 to i32
    %c0_i32_0 = arith.constant 0 : i32
    %2 = arith.cmpi ne, %1, %c0_i32_0 : i32
    scf.if %2 {
      %cst_18 = arith.constant 0.000000e+00 : f32
      %18 = vector.broadcast %cst_18 : f32 to vector<8x256xf32>
      %c0_19 = arith.constant 0 : index
      %c0_20 = arith.constant 0 : index
      %19 = vector.load %arg4[%c0_19, %c0_20] : memref<8x256xf32, #tpu.memory_space<vmem>>, vector<8x256xf32>
      tpu.vector_store %arg4[%c0_19, %c0_20], %18 {strides = array<i32>} : memref<8x256xf32, #tpu.memory_space<vmem>>, vector<8x256xf32>,
      %cst_21 = arith.constant 0.000000e+00 : f32
      %20 = vector.broadcast %cst_21 : f32 to vector<8x256xf32>
      %c0_22 = arith.constant 0 : index
      %c0_23 = arith.constant 0 : index
      %21 = vector.load %arg5[%c0_22, %c0_23] : memref<8x256xf32, #tpu.memory_space<vmem>>, vector<8x256xf32>
      tpu.vector_store %arg5[%c0_22, %c0_23], %20 {strides = array<i32>} : memref<8x256xf32, #tpu.memory_space<vmem>>, vector<8x256xf32>,
      %cst_24 = arith.constant 0.000000e+00 : f32
      %22 = vector.broadcast %cst_24 : f32 to vector<8x256xf32>
      %c0_25 = arith.constant 0 : index
      %c0_26 = arith.constant 0 : index
      %23 = vector.load %arg6[%c0_25, %c0_26] : memref<8x256xf32, #tpu.memory_space<vmem>>, vector<8x256xf32>
      tpu.vector_store %arg6[%c0_25, %c0_26], %22 {strides = array<i32>} : memref<8x256xf32, #tpu.memory_space<vmem>>, vector<8x256xf32>,
    } else {
    }
    %c0 = arith.constant 0 : index
    %c0_1 = arith.constant 0 : index
    %3 = vector.load %arg1[%c0, %c0_1] : memref<16x256xf32, #tpu.memory_space<vmem>>, vector<16x256xf32>
    %4 = arith.mulf %3, %3 : vector<16x256xf32>
    %5 = vector.shape_cast %4 : vector<16x256xf32> to vector<2x8x256xf32>
    %cst = arith.constant dense<0.000000e+00> : vector<8x256xf32>
    %6 = vector.multi_reduction <add>, %5, %cst [0] : vector<2x8x256xf32> to vector<8x256xf32>
    %c0_2 = arith.constant 0 : index
    %c0_3 = arith.constant 0 : index
    %7 = vector.load %arg4[%c0_2, %c0_3] : memref<8x256xf32, #tpu.memory_space<vmem>>, vector<8x256xf32>
    %8 = arith.addf %7, %6 : vector<8x256xf32>
    %c0_4 = arith.constant 0 : index
    %c0_5 = arith.constant 0 : index
    %9 = vector.load %arg4[%c0_4, %c0_5] : memref<8x256xf32, #tpu.memory_space<vmem>>, vector<8x256xf32>
    tpu.vector_store %arg4[%c0_4, %c0_5], %8 {strides = array<i32>} : memref<8x256xf32, #tpu.memory_space<vmem>>, vector<8x256xf32>,
    %c0_6 = arith.constant 0 : index
    %c0_7 = arith.constant 0 : index
    %10 = vector.load %arg2[%c0_6, %c0_7] : memref<8x256xf32, #tpu.memory_space<vmem>>, vector<8x256xf32>
    %c0_8 = arith.constant 0 : index
    %c0_9 = arith.constant 0 : index
    %11 = vector.load %arg5[%c0_8, %c0_9] : memref<8x256xf32, #tpu.memory_space<vmem>>, vector<8x256xf32>
    %12 = arith.addf %11, %10 : vector<8x256xf32>
    %c0_10 = arith.constant 0 : index
    %c0_11 = arith.constant 0 : index
    %13 = vector.load %arg5[%c0_10, %c0_11] : memref<8x256xf32, #tpu.memory_space<vmem>>, vector<8x256xf32>
    tpu.vector_store %arg5[%c0_10, %c0_11], %12 {strides = array<i32>} : memref<8x256xf32, #tpu.memory_space<vmem>>, vector<8x256xf32>,
    %c0_12 = arith.constant 0 : index
    %c0_13 = arith.constant 0 : index
    %14 = vector.load %arg3[%c0_12, %c0_13] : memref<8x256xf32, #tpu.memory_space<vmem>>, vector<8x256xf32>
    %c0_14 = arith.constant 0 : index
    %c0_15 = arith.constant 0 : index
    %15 = vector.load %arg6[%c0_14, %c0_15] : memref<8x256xf32, #tpu.memory_space<vmem>>, vector<8x256xf32>
    %16 = arith.addf %15, %14 : vector<8x256xf32>
    %c0_16 = arith.constant 0 : index
    %c0_17 = arith.constant 0 : index
    %17 = vector.load %arg6[%c0_16, %c0_17] : memref<8x256xf32, #tpu.memory_space<vmem>>, vector<8x256xf32>
    tpu.vector_store %arg6[%c0_16, %c0_17], %16 {strides = array<i32>} : memref<8x256xf32, #tpu.memory_space<vmem>>, vector<8x256xf32>,
    return
  }
  func.func @transform_0(%arg0: i32) -> (i32, i32) {
    %c0_i32 = arith.constant 0 : i32
    %c0_i32_0 = arith.constant 0 : i32
    %c0_i32_1 = arith.constant 0 : i32
    return %c0_i32, %c0_i32_0 : i32, i32
  }
  func.func @transform_1(%arg0: i32) -> (i32, i32) {
    %c0_i32 = arith.constant 0 : i32
    %c0_i32_0 = arith.constant 0 : i32
    %c0_i32_1 = arith.constant 0 : i32
    return %c0_i32, %c0_i32_0 : i32, i32
  }
  func.func @transform_2(%arg0: i32) -> (i32, i32) {
    %c0_i32 = arith.constant 0 : i32
    %c0_i32_0 = arith.constant 0 : i32
    %c0_i32_1 = arith.constant 0 : i32
    return %c0_i32, %c0_i32_0 : i32, i32
  }
  func.func @transform_3(%arg0: i32) -> (i32, i32) {
    %c0_i32 = arith.constant 0 : i32
    %c0_i32_0 = arith.constant 0 : i32
    %c0_i32_1 = arith.constant 0 : i32
    return %c0_i32, %c0_i32_0 : i32, i32
  }
  func.func @transform_4(%arg0: i32) -> (i32, i32) {
    %c0_i32 = arith.constant 0 : i32
    %c0_i32_0 = arith.constant 0 : i32
    %c0_i32_1 = arith.constant 0 : i32
    return %c0_i32, %c0_i32_0 : i32, i32
  }
  func.func @transform_5(%arg0: i32) -> (i32, i32) {
    %c0_i32 = arith.constant 0 : i32
    %c0_i32_0 = arith.constant 0 : i32
    %c0_i32_1 = arith.constant 0 : i32
    return %c0_i32, %c0_i32_0 : i32, i32
  }
}

</mosaic_0001>

<llo_original>
// kernel: glow_loss.1
$region0: #{glow_loss.1}
  #allocation0 [shape = 'u32[]', space=smem, size = 0x4, offset = 0x4, fixed_abs, tag = 'smem constant byte address 0x4 - core index']
  #allocation1 [shape = 'u32[144,128]{1,0:T(1,128)}', space=vmem, size = 0x12000, scoped, tag = 'internal scratch']
  %s0 = inlined_call_operand.vmem [shape: f32[16,256], index: 0, kind: input, shape index: {}]
  %s1 = inlined_call_operand.vmem [shape: f32[8,256], index: 1, kind: input, shape index: {}]
  %s2 = inlined_call_operand.vmem [shape: f32[8,256], index: 2, kind: input, shape index: {}]
  %s3 = inlined_call_operand.vmem [shape: f32[8,256], index: 3, kind: output, shape index: {0}]
  %s4 = inlined_call_operand.vmem [shape: f32[8,256], index: 4, kind: output, shape index: {1}]
  %s5 = inlined_call_operand.vmem [shape: f32[8,256], index: 5, kind: output, shape index: {2}]
  %6 = xla_tuple %s3, %s4, %s5
  %s7 = sld [smem:[#allocation0]]
  $region42: #{glow_loss.1} parent=0
    _
  %s9 = ssub.s32 1, %s7
  %s10 = scalar_select 0, %s9, %s7
  // Predicated region
  $region2: #{glow_loss.1} parent=0 // pred_check
    _
  $region3: #{glow_loss.1} parent=0 // pred_check_branch
    %12 = sbr.rel (0) target = $region5
  $region4: #{glow_loss.1} parent=0 // pred_region
    _
  $region5: #{glow_loss.1} parent=0 // pred_fallthru
    _
  // Predicated region
  $region6: #{glow_loss.1} parent=0 // pred_check
    _
  $region7: #{glow_loss.1} parent=0 // pred_check_branch
    %14 = sbr.rel (0) target = $region9
  $region8: #{glow_loss.1} parent=0 // pred_region
    _
  $region9: #{glow_loss.1} parent=0 // pred_fallthru
    _
  // Predicated region
  $region10: #{glow_loss.1} parent=0 // pred_check
    _
  $region11: #{glow_loss.1} parent=0 // pred_check_branch
    %16 = sbr.rel (0) target = $region13
  $region12: #{glow_loss.1} parent=0 // pred_region
    _
  $region13: #{glow_loss.1} parent=0 // pred_fallthru
    _
  %p17 = scmp.eq.s32.totalorder 0, 0
  // Predicated region
  $region14: #{glow_loss.1} parent=0 // pred_check
    %p18 = pneg %p17
  $region15: #{glow_loss.1} parent=0 // pred_check_branch
    %20 = sbr.rel (%p18) target = $region17
  $region16: #{glow_loss.1} parent=0 // pred_region
    %21 = vst [vmem:[%s3] sm:$0xff] 0.0
    %22 = vst [vmem:[%s3 + $0x8] sm:$0xff] 0.0
    %23 = vst [vmem:[%s4] sm:$0xff] 0.0
    %24 = vst [vmem:[%s4 + $0x8] sm:$0xff] 0.0
    %25 = vst [vmem:[%s5] sm:$0xff] 0.0
    %26 = vst [vmem:[%s5 + $0x8] sm:$0xff] 0.0
  $region17: #{glow_loss.1} parent=0 // pred_fallthru
    _
  %v27 = vld [vmem:[%s0] sm:$0xff]
  %v28 = vld [vmem:[%s0 + $0x8] sm:$0xff]
  %v29 = vld [vmem:[%s0 + $0x10] sm:$0xff]
  %v30 = vld [vmem:[%s0 + $0x18] sm:$0xff]
  %v31 = vmul.f32 %v27, %v27
  %v32 = vmul.f32 %v28, %v28
  %v33 = vmul.f32 %v29, %v29
  %v34 = vmul.f32 %v30, %v30
  %v35 = vadd.f32 %v31, %v33
  %v36 = vadd.f32 %v32, %v34
  %v37 = vld [vmem:[%s3] sm:$0xff]
  %v38 = vld [vmem:[%s3 + $0x8] sm:$0xff]
  %v39 = vadd.f32 %v37, %v35
  %v40 = vadd.f32 %v38, %v36
  %41 = vst [vmem:[%s3] sm:$0xff] %v39
  %42 = vst [vmem:[%s3 + $0x8] sm:$0xff] %v40
  %v43 = vld [vmem:[%s1] sm:$0xff]
  %v44 = vld [vmem:[%s1 + $0x8] sm:$0xff]
  %v45 = vld [vmem:[%s4] sm:$0xff]
  %v46 = vld [vmem:[%s4 + $0x8] sm:$0xff]
  %v47 = vadd.f32 %v45, %v43
  %v48 = vadd.f32 %v46, %v44
  %49 = vst [vmem:[%s4] sm:$0xff] %v47
  %50 = vst [vmem:[%s4 + $0x8] sm:$0xff] %v48
  %v51 = vld [vmem:[%s2] sm:$0xff]
  %v52 = vld [vmem:[%s2 + $0x8] sm:$0xff]
  %v53 = vld [vmem:[%s5] sm:$0xff]
  %v54 = vld [vmem:[%s5 + $0x8] sm:$0xff]
  %v55 = vadd.f32 %v53, %v51
  %v56 = vadd.f32 %v54, %v52
  %57 = vst [vmem:[%s5] sm:$0xff] %v55
  %58 = vst [vmem:[%s5 + $0x8] sm:$0xff] %v56
  // Predicated region
  $region18: #{glow_loss.1} parent=0 // pred_check
    _
  $region19: #{glow_loss.1} parent=0 // pred_check_branch
    %60 = sbr.rel (0) target = $region21
  $region20: #{glow_loss.1} parent=0 // pred_region
    _
  $region21: #{glow_loss.1} parent=0 // pred_fallthru
    _
  // Predicated region
  $region22: #{glow_loss.1} parent=0 // pred_check
    _
  $region23: #{glow_loss.1} parent=0 // pred_check_branch
    %62 = sbr.rel (0) target = $region25
  $region24: #{glow_loss.1} parent=0 // pred_region
    _
  $region25: #{glow_loss.1} parent=0 // pred_fallthru
    _
  // Predicated region
  $region26: #{glow_loss.1} parent=0 // pred_check
    _
  $region27: #{glow_loss.1} parent=0 // pred_check_branch
    %64 = sbr.rel (0) target = $region29
  $region28: #{glow_loss.1} parent=0 // pred_region
    _
  $region29: #{glow_loss.1} parent=0 // pred_fallthru
    _
  // Predicated region
  $region30: #{glow_loss.1} parent=0 // pred_check
    _
  $region31: #{glow_loss.1} parent=0 // pred_check_branch
    %66 = sbr.rel (0) target = $region33
  $region32: #{glow_loss.1} parent=0 // pred_region
    _
  $region33: #{glow_loss.1} parent=0 // pred_fallthru
    _
  // Predicated region
  $region34: #{glow_loss.1} parent=0 // pred_check
    _
  $region35: #{glow_loss.1} parent=0 // pred_check_branch
    %68 = sbr.rel (0) target = $region37
  $region36: #{glow_loss.1} parent=0 // pred_region
    _
  $region37: #{glow_loss.1} parent=0 // pred_fallthru
    _
  // Predicated region
  $region38: #{glow_loss.1} parent=0 // pred_check
    _
  $region39: #{glow_loss.1} parent=0 // pred_check_branch
    %70 = sbr.rel (0) target = $region41
  $region40: #{glow_loss.1} parent=0 // pred_region
    _
  $region41: #{glow_loss.1} parent=0 // pred_fallthru
    _

</llo_original>
